<compile_context>
chip_gen: v7x
topology: tpu7x:2x2x1
jax: 0.10.0
libtpu: 0.0.40
codegen_flags: <defaults>
</compile_context>

<pallas_src>
import functools

import jax
import jax.numpy as jnp
from jax import lax
from jax.experimental import pallas as pl
from jax.experimental.pallas import tpu as pltpu


def _wm_detection_loss_kernel(flag_ref, pos_ref, neg_ref, mask_ref, out_ref,
                              acc_ref, *, p_scale: float, n_scale: float,
                              seq_len: int, tile_t: int):
    t = pl.program_id(0)
    num_t = pl.num_programs(0)

    # ---- init accumulators (SMEM scratch persists across the T grid) -------
    @pl.when(t == 0)
    def _init():
        acc_ref[0] = jnp.float32(0.0)   # sum of log(selected positive prob)
        acc_ref[1] = jnp.float32(0.0)   # sum of log(negative class-0 prob)

    # ---- positive path: always computed ------------------------------------
    pos0 = pos_ref[:, 0, :].astype(jnp.float32)           # (B, tile_t)
    pos1 = pos_ref[:, 1, :].astype(jnp.float32)           # (B, tile_t)
    m0 = mask_ref[:, 0, :]                                 # (B, tile_t) target

    # Lane validity for the (possibly partial) last tile.
    lane = lax.broadcasted_iota(jnp.int32, pos0.shape, 1)
    valid = (t * tile_t + lane) < seq_len                  # (B, tile_t) bool

    # NLL target = int(mask[:,0,:]) in {0,1} (torch-style truncation).  Select
    # the probability before the log; invalid lanes select 1.0 so they add
    # exactly log(1) = 0 to the running sum.
    tgt_is_one = m0.astype(jnp.int32) == 1
    p_sel = jnp.where(valid, jnp.where(tgt_is_one, pos1, pos0), jnp.float32(1.0))
    acc_ref[0] += jnp.sum(jnp.log(p_sel))

    # ---- negative path: only if mask is all ones (flag prefetched) ---------
    @pl.when(flag_ref[0] == 1)
    def _neg():
        neg0 = neg_ref[:, 0, :].astype(jnp.float32)        # (B, tile_t)
        n_sel = jnp.where(valid, neg0, jnp.float32(1.0))
        acc_ref[1] += jnp.sum(jnp.log(n_sel))

    # ---- finalize: scale once, apply the branch, write scalar out ----------
    @pl.when(t == num_t - 1)
    def _finalize():
        loss = p_scale * acc_ref[0]                         # p_scale = -p_w/(B*T)
        loss = loss + jnp.where(flag_ref[0] == 1,
                                n_scale * acc_ref[1],       # n_scale = -n_w/(B*T)
                                jnp.float32(0.0))
        out_ref[0] = loss


def wm_detection_loss(positive, negative, mask,
                      p_weight: float = 1.0, n_weight: float = 1.0,
                      tile_t: int = 2048):
    """Pallas implementation of WMDetectionLoss.forward (returns scalar f32)."""
    B, C, T = positive.shape
    Bm, Cm, Tm = mask.shape
    assert C >= 2, "positive needs at least 2 class channels"
    assert negative.shape[0] == B and negative.shape[2] == T
    assert negative.shape[1] >= 1
    assert Bm == B and Tm == T
    Cn = negative.shape[1]

    # torch.all(mask == 1): one cheap XLA pass; gates the negative branch and
    # (via scalar prefetch) pins the negative stream's block index so its DMA
    # is not re-issued when the branch is dead.
    all_ones = jnp.all(mask == 1).astype(jnp.int32).reshape((1,))

    # Lane-dense T tiling sized so the double-buffered input blocks stay well
    # inside the default scoped VMEM on v5e/v6e/v7x.
    bytes_per_col = B * (C * jnp.dtype(positive.dtype).itemsize
                         + Cn * jnp.dtype(negative.dtype).itemsize
                         + Cm * jnp.dtype(mask.dtype).itemsize)
    vmem_budget = 8 * 1024 * 1024
    max_tile_by_vmem = max(128, (vmem_budget // (2 * bytes_per_col)) // 128 * 128)
    tile_t = max(128, (min(tile_t, max_tile_by_vmem) // 128) * 128)
    if T <= tile_t:
        tile_t = T            # full-dim block: (8,128) rule satisfied by equality
    num_t = pl.cdiv(T, tile_t)

    # Fold NLL sign, loss weights and the 1/(B*T) mean into two static scales.
    p_scale = -float(p_weight) / float(B * T)
    n_scale = -float(n_weight) / float(B * T)

    kernel = functools.partial(_wm_detection_loss_kernel,
                               p_scale=p_scale, n_scale=n_scale,
                               seq_len=T, tile_t=tile_t)

    out = pl.pallas_call(
        kernel,
        out_shape=jax.ShapeDtypeStruct((1,), jnp.float32),
        grid_spec=pltpu.PrefetchScalarGridSpec(
            num_scalar_prefetch=1,
            grid=(num_t,),
            in_specs=[
                # Native-dtype streams straight from HBM; kernel upcasts.
                pl.BlockSpec((B, C, tile_t), lambda t, flag: (0, 0, t)),
                # When the mask is not all ones, pin block 0: no re-DMA.
                pl.BlockSpec((B, Cn, tile_t),
                             lambda t, flag: (0, 0, t * flag[0])),
                pl.BlockSpec((B, Cm, tile_t), lambda t, flag: (0, 0, t)),
            ],
            out_specs=pl.BlockSpec((1,), lambda t, flag: (0,),
                                   memory_space=pltpu.MemorySpace.SMEM),
            scratch_shapes=[pltpu.SMEM((2,), jnp.float32)],
        ),
        compiler_params=pltpu.CompilerParams(
            # The single T axis carries the accumulators -> "arbitrary".
            dimension_semantics=("arbitrary",)),
    )(all_ones, positive, negative, mask)
    return out[0]


def _reference(positive, negative, mask, p_weight=1.0, n_weight=1.0):
    """Pure-JAX reference mirroring the PyTorch module."""
    pos = positive.astype(jnp.float32)[:, :2, :]
    neg = negative.astype(jnp.float32)[:, :2, :]
    tgt = mask[:, 0, :].astype(jnp.int32)
    log_pos_sel = jnp.take_along_axis(jnp.log(pos), tgt[:, None, :], axis=1)[:, 0, :]
    loss_p = p_weight * jnp.mean(-log_pos_sel)
    loss_n = n_weight * jnp.mean(-jnp.log(neg[:, 0, :]))
    return jnp.where(jnp.all(mask == 1), loss_p + loss_n, loss_p)


if __name__ == "__main__":
    key = jax.random.PRNGKey(0)
    B, C, T = 2, 4, 16
    k1, k2, k3, k4 = jax.random.split(key, 4)

    # "Detector outputs": probabilities over channels (softmax so log is valid).
    positive = jax.nn.softmax(jax.random.normal(k1, (B, C, T)), axis=1)
    negative = jax.nn.softmax(jax.random.normal(k2, (B, C, T)), axis=1)
    mask_all_ones = jnp.ones((B, 1, T), jnp.float32)
    mask_mixed = (jax.random.uniform(k3, (B, 1, T)) > 0.5).astype(jnp.float32)

    # 1) all-ones mask (positive + negative branch), non-default weights.
    loss_all = wm_detection_loss(positive, negative, mask_all_ones,
                                 p_weight=0.7, n_weight=1.3)
    ref_all = _reference(positive, negative, mask_all_ones,
                         p_weight=0.7, n_weight=1.3)

    # 2) mixed mask (positive-only branch; negative stream DMA pinned).
    loss_mix = wm_detection_loss(positive, negative, mask_mixed)
    ref_mix = _reference(positive, negative, mask_mixed)

    # 3) bf16 inputs stay bf16 on the HBM side; kernel upcasts after the load.
    loss_bf16 = wm_detection_loss(positive.astype(jnp.bfloat16),
                                  negative.astype(jnp.bfloat16), mask_mixed)

    # 4) longer sequence -> multi-tile grid with a partial (masked) last tile.
    T2 = 5000
    pos2 = jax.nn.softmax(jax.random.normal(k4, (B, C, T2)), axis=1)
    neg2 = jax.nn.softmax(jax.random.normal(k1, (B, C, T2)), axis=1)
    mask2 = (jax.random.uniform(k2, (B, 1, T2)) > 0.5).astype(jnp.float32)
    loss_big = wm_detection_loss(pos2, neg2, mask2)
    ref_big = _reference(pos2, neg2, mask2)

    # 5) longer sequence, all-ones mask (negative branch across many tiles).
    mask2_ones = jnp.ones((B, 1, T2), jnp.float32)
    loss_big_all = wm_detection_loss(pos2, neg2, mask2_ones)
    ref_big_all = _reference(pos2, neg2, mask2_ones)

    jax.block_until_ready((loss_all, loss_mix, loss_bf16, loss_big, loss_big_all))

    assert jnp.allclose(loss_all, ref_all, atol=1e-5), (loss_all, ref_all)
    assert jnp.allclose(loss_mix, ref_mix, atol=1e-5), (loss_mix, ref_mix)
    assert jnp.allclose(loss_bf16, ref_mix, atol=2e-2), (loss_bf16, ref_mix)
    assert jnp.allclose(loss_big, ref_big, atol=1e-4), (loss_big, ref_big)
    assert jnp.allclose(loss_big_all, ref_big_all, atol=1e-4), (loss_big_all, ref_big_all)
    print("KERNEL_OK")
</pallas_src>

<mosaic_0001>
module attributes {stable_mosaic.version = 11 : i64} {
  func.func @_wm_detection_loss_kernel(%arg0: i32, %arg1: memref<1xi32, #tpu.memory_space<smem>>, %arg2: memref<2x4x16xf32, #tpu.memory_space<vmem>>, %arg3: memref<2x4x16xf32, #tpu.memory_space<vmem>>, %arg4: memref<2x1x16xf32, #tpu.memory_space<vmem>>, %arg5: memref<1xf32, #tpu.memory_space<smem>>, %arg6: memref<2xf32, #tpu.memory_space<smem>>) attributes {dimension_semantics = [#tpu.dimension_semantics<arbitrary>], iteration_bounds = array<i64: 1>, scalar_prefetch = 1 : i64, scratch_operands = 1 : i64, tpu.core_type = #tpu.core_type<tc>, window_params = [{transform_indices = @transform_0, window_bounds = array<i64: 2, 4, 16>}, {transform_indices = @transform_1, window_bounds = array<i64: 2, 4, 16>}, {transform_indices = @transform_2, window_bounds = array<i64: 2, 1, 16>}, {transform_indices = @transform_3, window_bounds = array<i64: 1>}]} {
    %c0_i32 = arith.constant 0 : i32
    %0 = arith.cmpi eq, %arg0, %c0_i32 : i32
    %1 = arith.extui %0 : i1 to i32
    %c0_i32_0 = arith.constant 0 : i32
    %2 = arith.cmpi ne, %1, %c0_i32_0 : i32
    scf.if %2 {
      %cst_17 = arith.constant 0.000000e+00 : f32
      %c0_18 = arith.constant 0 : index
      %36 = memref.load %arg6[%c0_18] : memref<2xf32, #tpu.memory_space<smem>>
      memref.store %cst_17, %arg6[%c0_18] : memref<2xf32, #tpu.memory_space<smem>>
      %cst_19 = arith.constant 0.000000e+00 : f32
      %c1_20 = arith.constant 1 : index
      %37 = memref.load %arg6[%c1_20] : memref<2xf32, #tpu.memory_space<smem>>
      memref.store %cst_19, %arg6[%c1_20] : memref<2xf32, #tpu.memory_space<smem>>
    } else {
    }
    %c0 = arith.constant 0 : index
    %c0_1 = arith.constant 0 : index
    %c0_2 = arith.constant 0 : index
    %3 = vector.load %arg2[%c0, %c0_1, %c0_2] : memref<2x4x16xf32, #tpu.memory_space<vmem>>, vector<2x1x16xf32>
    %4 = vector.shape_cast %3 : vector<2x1x16xf32> to vector<2x16xf32>
    %c0_3 = arith.constant 0 : index
    %c1 = arith.constant 1 : index
    %c0_4 = arith.constant 0 : index
    %5 = vector.load %arg2[%c0_3, %c1, %c0_4] : memref<2x4x16xf32, #tpu.memory_space<vmem>>, vector<2x1x16xf32>
    %6 = vector.shape_cast %5 : vector<2x1x16xf32> to vector<2x16xf32>
    %c0_5 = arith.constant 0 : index
    %c0_6 = arith.constant 0 : index
    %c0_7 = arith.constant 0 : index
    %7 = vector.load %arg4[%c0_5, %c0_6, %c0_7] : memref<2x1x16xf32, #tpu.memory_space<vmem>>, vector<2x1x16xf32>
    %8 = vector.shape_cast %7 : vector<2x1x16xf32> to vector<2x16xf32>
    %9 = tpu.iota {dimensions = array<i32: 1>} : vector<2x16xi32>
    %c16_i32 = arith.constant 16 : i32
    %10 = arith.muli %arg0, %c16_i32 : i32
    %11 = vector.broadcast %10 : i32 to vector<2x16xi32>
    %12 = arith.addi %11, %9 : vector<2x16xi32>
    %c16_i32_8 = arith.constant 16 : i32
    %13 = vector.broadcast %c16_i32_8 : i32 to vector<2x16xi32>
    %14 = arith.cmpi slt, %12, %13 : vector<2x16xi32>
    %15 = arith.fptosi %8 : vector<2x16xf32> to vector<2x16xi32>
    %c1_i32 = arith.constant 1 : i32
    %16 = vector.broadcast %c1_i32 : i32 to vector<2x16xi32>
    %17 = arith.cmpi eq, %15, %16 : vector<2x16xi32>
    %18 = arith.select %17, %6, %4 : vector<2x16xi1>, vector<2x16xf32>
    %cst = arith.constant 1.000000e+00 : f32
    %19 = vector.broadcast %cst : f32 to vector<2x16xf32>
    %20 = arith.select %14, %18, %19 : vector<2x16xi1>, vector<2x16xf32>
    %c0_9 = arith.constant 0 : index
    %21 = memref.load %arg6[%c0_9] : memref<2xf32, #tpu.memory_space<smem>>
    %22 = math.log %20 : vector<2x16xf32>
    %23 = vector.shape_cast %22 : vector<2x16xf32> to vector<1x2x16xf32>
    %cst_10 = arith.constant dense<0.000000e+00> : vector<1xf32>
    %24 = vector.multi_reduction <add>, %23, %cst_10 [1, 2] : vector<1x2x16xf32> to vector<1xf32>
    %25 = vector.shape_cast %24 : vector<1xf32> to vector<1x1x1xf32>
    %26 = vector.extract %25[0, 0, 0] : f32 from vector<1x1x1xf32>
    %27 = arith.addf %21, %26 : f32
    %c0_11 = arith.constant 0 : index
    %28 = memref.load %arg6[%c0_11] : memref<2xf32, #tpu.memory_space<smem>>
    memref.store %27, %arg6[%c0_11] : memref<2xf32, #tpu.memory_space<smem>>
    %c0_12 = arith.constant 0 : index
    %29 = memref.load %arg1[%c0_12] : memref<1xi32, #tpu.memory_space<smem>>
    %c1_i32_13 = arith.constant 1 : i32
    %30 = arith.cmpi eq, %29, %c1_i32_13 : i32
    %31 = arith.extui %30 : i1 to i32
    %c0_i32_14 = arith.constant 0 : i32
    %32 = arith.cmpi ne, %31, %c0_i32_14 : i32
    scf.if %32 {
      %c0_17 = arith.constant 0 : index
      %c0_18 = arith.constant 0 : index
      %c0_19 = arith.constant 0 : index
      %36 = vector.load %arg3[%c0_17, %c0_18, %c0_19] : memref<2x4x16xf32, #tpu.memory_space<vmem>>, vector<2x1x16xf32>
      %37 = vector.shape_cast %36 : vector<2x1x16xf32> to vector<2x16xf32>
      %cst_20 = arith.constant 1.000000e+00 : f32
      %38 = vector.broadcast %cst_20 : f32 to vector<2x16xf32>
      %39 = arith.select %14, %37, %38 : vector<2x16xi1>, vector<2x16xf32>
      %c1_21 = arith.constant 1 : index
      %40 = memref.load %arg6[%c1_21] : memref<2xf32, #tpu.memory_space<smem>>
      %41 = math.log %39 : vector<2x16xf32>
      %42 = vector.shape_cast %41 : vector<2x16xf32> to vector<1x2x16xf32>
      %cst_22 = arith.constant dense<0.000000e+00> : vector<1xf32>
      %43 = vector.multi_reduction <add>, %42, %cst_22 [1, 2] : vector<1x2x16xf32> to vector<1xf32>
      %44 = vector.shape_cast %43 : vector<1xf32> to vector<1x1x1xf32>
      %45 = vector.extract %44[0, 0, 0] : f32 from vector<1x1x1xf32>
      %46 = arith.addf %40, %45 : f32
      %c1_23 = arith.constant 1 : index
      %47 = memref.load %arg6[%c1_23] : memref<2xf32, #tpu.memory_space<smem>>
      memref.store %46, %arg6[%c1_23] : memref<2xf32, #tpu.memory_space<smem>>
    } else {
    }
    %c0_i32_15 = arith.constant 0 : i32
    %33 = arith.cmpi eq, %arg0, %c0_i32_15 : i32
    %34 = arith.extui %33 : i1 to i32
    %c0_i32_16 = arith.constant 0 : i32
    %35 = arith.cmpi ne, %34, %c0_i32_16 : i32
    scf.if %35 {
      %c0_17 = arith.constant 0 : index
      %36 = memref.load %arg6[%c0_17] : memref<2xf32, #tpu.memory_space<smem>>
      %cst_18 = arith.constant -2.187500e-02 : f32
      %37 = arith.mulf %cst_18, %36 : f32
      %c0_19 = arith.constant 0 : index
      %38 = memref.load %arg1[%c0_19] : memref<1xi32, #tpu.memory_space<smem>>
      %c1_i32_20 = arith.constant 1 : i32
      %39 = arith.cmpi eq, %38, %c1_i32_20 : i32
      %c1_21 = arith.constant 1 : index
      %40 = memref.load %arg6[%c1_21] : memref<2xf32, #tpu.memory_space<smem>>
      %cst_22 = arith.constant -4.062500e-02 : f32
      %41 = arith.mulf %cst_22, %40 : f32
      %cst_23 = arith.constant 0.000000e+00 : f32
      %42 = arith.select %39, %41, %cst_23 : f32
      %43 = arith.addf %37, %42 : f32
      %c0_24 = arith.constant 0 : index
      %44 = memref.load %arg5[%c0_24] : memref<1xf32, #tpu.memory_space<smem>>
      memref.store %43, %arg5[%c0_24] : memref<1xf32, #tpu.memory_space<smem>>
    } else {
    }
    return
  }
  func.func @transform_0(%arg0: i32, %arg1: memref<1xi32, #tpu.memory_space<smem>>) -> (i32, i32, i32) {
    %c0_i32 = arith.constant 0 : i32
    %c0_i32_0 = arith.constant 0 : i32
    %c0_i32_1 = arith.constant 0 : i32
    return %c0_i32, %c0_i32_0, %arg0 : i32, i32, i32
  }
  func.func @transform_1(%arg0: i32, %arg1: memref<1xi32, #tpu.memory_space<smem>>) -> (i32, i32, i32) {
    %c0 = arith.constant 0 : index
    %0 = memref.load %arg1[%c0] : memref<1xi32, #tpu.memory_space<smem>>
    %1 = arith.muli %arg0, %0 : i32
    %c0_i32 = arith.constant 0 : i32
    %c0_i32_0 = arith.constant 0 : i32
    %c0_i32_1 = arith.constant 0 : i32
    return %c0_i32, %c0_i32_0, %1 : i32, i32, i32
  }
  func.func @transform_2(%arg0: i32, %arg1: memref<1xi32, #tpu.memory_space<smem>>) -> (i32, i32, i32) {
    %c0_i32 = arith.constant 0 : i32
    %c0_i32_0 = arith.constant 0 : i32
    %c0_i32_1 = arith.constant 0 : i32
    return %c0_i32, %c0_i32_0, %arg0 : i32, i32, i32
  }
  func.func @transform_3(%arg0: i32, %arg1: memref<1xi32, #tpu.memory_space<smem>>) -> i32 {
    %c0_i32 = arith.constant 0 : i32
    %c0_i32_0 = arith.constant 0 : i32
    return %c0_i32 : i32
  }
}

</mosaic_0001>

<llo_original>
// kernel: tpu_custom_call.1
$region0: #{tpu_custom_call.1}
  #allocation0 [shape = 'u32[]', space=smem, size = 0x4, offset = 0x4, fixed_abs, tag = 'smem constant byte address 0x4 - core index']
  #allocation1 [shape = 'u32[144,128]{1,0:T(1,128)}', space=vmem, size = 0x12000, scoped, tag = 'internal scratch']
  #allocation2 [shape = 'f32[2]{0:T(128)}', space=smem, size = 0x200, scoped, tag = 'scratch operand']
  #allocation3 [shape = 's32[1]{0}', space=sflag, size = 0x4, scoped, tag = 'scoped memory for tpu_custom_call.1']
  #allocation4 [shape = 's32[1]{0:T(128)S(6)}', space=smem, size = 0x200, scoped, tag = 'prefetched SMEM operand 0']
  %s0 = inlined_call_operand.<no memory space> [shape: s32[1], index: 0, kind: input, shape index: {}]
  %s1 = inlined_call_operand.hbm [shape: f32[2,4,16], index: 1, kind: input, shape index: {}]
  %s2 = inlined_call_operand.hbm [shape: f32[2,4,16], index: 2, kind: input, shape index: {}]
  %s3 = inlined_call_operand.vmem [shape: f32[2,1,16], index: 3, kind: input, shape index: {}]
  %s4 = inlined_call_operand.hbm [shape: f32[1], index: 4, kind: output, shape index: {}]
  %s5 = sld [smem:[#allocation0]]
  $region42: #{tpu_custom_call.1} parent=0
    _
  %s7 = ssub.s32 1, %s5
  %s8 = scalar_select 0, %s7, %s5
  %9 = sst [smem:[#allocation4]] %s0
  $region1: #{tpu_custom_call.1} parent=0
    #allocation5 [shape = 'u8[4096]{0}', space=vmem, size = 0x1000, scoped, tag = 'input window, operand 1, single buffered']
    #allocation6 [shape = 's32[1]{0}', space=sflag, size = 0x4, scoped, tag = 'scoped memory for tpu_custom_call.1']
    #allocation7 [shape = 's32[1]{0}', space=sflag, size = 0x4, scoped, tag = 'scoped memory for tpu_custom_call.1']
    #allocation8 [shape = 'u8[4096]{0}', space=vmem, size = 0x1000, scoped, tag = 'input window, operand 2, single buffered']
    #allocation9 [shape = 's32[1]{0}', space=sflag, size = 0x4, scoped, tag = 'scoped memory for tpu_custom_call.1']
    #allocation10 [shape = 'u8[512]{0}', space=smem, size = 0x200, scoped, tag = 'output window, operand 0, single buffered']
    %10 = vsyncpa [#allocation6], 0
    %11 = vsyncpa [#allocation9], 0
    %12 = vsyncpa [#allocation7], 0
    // Predicated region
    $region2: #{tpu_custom_call.1} parent=1 // pred_check
      _
    $region3: #{tpu_custom_call.1} parent=1 // pred_check_branch
      %14 = sbr.rel (0) target = $region5
    $region4: #{tpu_custom_call.1} parent=1 // pred_region
      %s16 = ssub.s32 128, 128
      %17 = vsyncadd [#allocation6], %s16
      %s18 = sshll.u32 [#allocation5], 4
      %s19 = int_to_ptr.vmem [resolvable:$true] %s18
      %24 = dma.hbm_to_vmem [thread:$0]  %s1, 128, %s19, [#allocation6], 64, 64, 4
    $region5: #{tpu_custom_call.1} parent=1 // pred_fallthru
      _
    // Predicated region
    $region6: #{tpu_custom_call.1} parent=1 // pred_check
      _
    $region7: #{tpu_custom_call.1} parent=1 // pred_check_branch
      %26 = sbr.rel (0) target = $region9
    $region8: #{tpu_custom_call.1} parent=1 // pred_region
      %s27 = sld [smem:[#allocation4]]
      %s28 = smul.u32 0, %s27
      %s30 = ssub.s32 128, 128
      %31 = vsyncadd [#allocation9], %s30
      %s32 = smul.addr %s28, 64
      %s33 = scalar_lea.hbm %s2, %s32
      %s34 = sshll.u32 [#allocation8], 4
      %s35 = int_to_ptr.vmem [resolvable:$true] %s34
      %40 = dma.hbm_to_vmem [thread:$0]  %s33, 128, %s35, [#allocation9], 64, 64, 4
    $region9: #{tpu_custom_call.1} parent=1 // pred_fallthru
      _
    // Predicated region
    $region10: #{tpu_custom_call.1} parent=1 // pred_check
      _
    $region11: #{tpu_custom_call.1} parent=1 // pred_check_branch
      %42 = sbr.rel (0) target = $region13
    $region12: #{tpu_custom_call.1} parent=1 // pred_region
      _
    $region13: #{tpu_custom_call.1} parent=1 // pred_fallthru
      _
    // Predicated region
    $region14: #{tpu_custom_call.1} parent=1 // pred_check
      _
    $region15: #{tpu_custom_call.1} parent=1 // pred_check_branch
      %44 = sbr.rel (0) target = $region17
    $region16: #{tpu_custom_call.1} parent=1 // pred_region
      %45 = dma.done [#allocation6], 128
    $region17: #{tpu_custom_call.1} parent=1 // pred_fallthru
      _
    // Predicated region
    $region18: #{tpu_custom_call.1} parent=1 // pred_check
      _
    $region19: #{tpu_custom_call.1} parent=1 // pred_check_branch
      %47 = sbr.rel (0) target = $region21
    $region20: #{tpu_custom_call.1} parent=1 // pred_region
      %48 = dma.done [#allocation9], 128
    $region21: #{tpu_custom_call.1} parent=1 // pred_fallthru
      _
    %s49 = sld [smem:[#allocation4]]
    %s50 = smul.u32 0, %s49
    %p51 = scmp.eq.s32.totalorder 0, 0
    // Predicated region
    $region22: #{tpu_custom_call.1} parent=1 // pred_check
      %p52 = pneg %p51
    $region23: #{tpu_custom_call.1} parent=1 // pred_check_branch
      %54 = sbr.rel (%p52) target = $region25
    $region24: #{tpu_custom_call.1} parent=1 // pred_region
      %s55 = scalar_lea.smem [#allocation2], 0
      %56 = sst [smem:[%s55]] 0.0
      %s57 = scalar_lea.smem [#allocation2], 1
      %58 = sst [smem:[%s57]] 0.0
    $region25: #{tpu_custom_call.1} parent=1 // pred_fallthru
      _
    %v59 = vld [vmem:[#allocation5] sm:$0x1]
    %v60 = vld [vmem:[#allocation5 + $0x4] sm:$0x1]
    %v61 = vld [vmem:[#allocation5 + $0x1] sm:$0x1]
    %v62 = vld [vmem:[#allocation5 + $0x5] sm:$0x1]
    %v63 = vld [vmem:[%s3] sm:$0x1]
    %v64 = vld [vmem:[%s3 + $0x1] sm:$0x1]
    %v65 = vlaneseq
    %v66 = vand.u32 %v65, 127
    %s67 = smul.u32 0, 16
    %v68 = vstv %s67
    %v69 = vadd.s32 %v68, %v66
    %vm70 = vcmp.lt.s32.totalorder %v69, 16
    %v71 = vcvt.f32.s32.to.zero.pseudo %v63
    %v72 = vcvt.f32.s32.to.zero.pseudo %v64
    %vm73 = vcmp.eq.s32.totalorder %v71, 1
    %vm74 = vcmp.eq.s32.totalorder %v72, 1
    %v75 = vsel %vm73, %v61, %v59
    %v76 = vsel %vm74, %v62, %v60
    %v79 = vcombine.low %v75, %v76
    %v81 = vunpack.c.l.s4 1966171168
    %v82 = vunpack.c.0.s8 %v81
    %v83 = vlaneseq
    %v84 = vshrl.u32 %v83, 7
    %v85 = vsub.s32 %v82, %v84
    %v86 = vrot.slane %v79, %v85
    %v88 = vunpack.c.l.s4 1966171168
    %v89 = vunpack.c.0.s8 %v88
    %v90 = vlaneseq
    %v91 = vshrl.u32 %v90, 7
    %v92 = vsub.s32 %v89, %v91
    %v93 = vrot.slane %v86, %v92
    %v95 = vsel %vm70, %v93, 1.0
    %s96 = sld [smem:[#allocation2]]
    %v97 = vlog2.pop %v95
    %v98 = vmul.f32 %v97, 0.6931472
    %vm99 = vcmask 123904
    %v100 = vsel %vm99, %v98, 0.0
    %101 = vadd.xlane.f32.xlu0 %v100
    %v102 = vpop.xlane.xlu0 %101
    %v103 = vrot.slane %v102, 4
    %v104 = vadd.f32 %v102, %v103
    %v105 = vrot.slane %v104, 2
    %v106 = vadd.f32 %v104, %v105
    %v107 = vrot.slane %v106, 1
    %v108 = vadd.f32 %v106, %v107
    %s109 = vtos %v108
    %s110 = sadd.f32 %s96, %s109
    %s111 = scalar_lea.smem [#allocation2], 0
    %112 = sst [smem:[%s111]] %s110
    %s113 = sld [smem:[#allocation4]]
    %p114 = scmp.eq.s32.totalorder %s113, 1
    // Predicated region
    $region26: #{tpu_custom_call.1} parent=1 // pred_check
      %p115 = pneg %p114
    $region27: #{tpu_custom_call.1} parent=1 // pred_check_branch
      %117 = sbr.rel (%p115) target = $region29
    $region28: #{tpu_custom_call.1} parent=1 // pred_region
      %v118 = vld [vmem:[#allocation8] sm:$0x1]
      %v119 = vld [vmem:[#allocation8 + $0x4] sm:$0x1]
      %v122 = vrot.slane %v119, 7
      %vm123 = vcmask 1041409
      %v124 = vsel %vm123, %v122, %v118
      %v126 = vsel %vm70, %v124, 1.0
      %s127 = sld [smem:[#allocation2 + $0x1]]
      %v128 = vlog2.pop %v126
      %v129 = vmul.f32 %v128, 0.6931472
      %v130 = vsel %vm99, %v129, 0.0
      %131 = vadd.xlane.f32.xlu0 %v130
      %v132 = vpop.xlane.xlu0 %131
      %v133 = vrot.slane %v132, 4
      %v134 = vadd.f32 %v132, %v133
      %v135 = vrot.slane %v134, 2
      %v136 = vadd.f32 %v134, %v135
      %v137 = vrot.slane %v136, 1
      %v138 = vadd.f32 %v136, %v137
      %s139 = vtos %v138
      %s140 = sadd.f32 %s127, %s139
      %s141 = scalar_lea.smem [#allocation2], 1
      %142 = sst [smem:[%s141]] %s140
    $region29: #{tpu_custom_call.1} parent=1 // pred_fallthru
      _
    // Predicated region
    $region30: #{tpu_custom_call.1} parent=1 // pred_check
      %p143 = pneg %p51
    $region31: #{tpu_custom_call.1} parent=1 // pred_check_branch
      %145 = sbr.rel (%p143) target = $region33
    $region32: #{tpu_custom_call.1} parent=1 // pred_region
      %s146 = sld [smem:[#allocation2]]
      %s147 = smul.f32 %s146, -0.021875
      %s148 = sld [smem:[#allocation4]]
      %p149 = scmp.eq.s32.totalorder %s148, 1
      %s150 = sld [smem:[#allocation2 + $0x1]]
      %s151 = smul.f32 %s150, -0.040625
      %s152 = scalar_select %p149, %s151, 0.0
      %s153 = sadd.f32 %s147, %s152
      %s154 = scalar_lea.smem [#allocation10], 0
      %155 = sst [smem:[%s154]] %s153
    $region33: #{tpu_custom_call.1} parent=1 // pred_fallthru
      _
    // Predicated region
    $region34: #{tpu_custom_call.1} parent=1 // pred_check
      _
    $region35: #{tpu_custom_call.1} parent=1 // pred_check_branch
      %157 = sbr.rel (0) target = $region37
    $region36: #{tpu_custom_call.1} parent=1 // pred_region
      %s159 = ssub.s32 16, 16
      %160 = vsyncadd [#allocation7], %s159
      %163 = dma.smem_to_hbm [#allocation10], 16, %s4, [#allocation7]
    $region37: #{tpu_custom_call.1} parent=1 // pred_fallthru
      _
    // Predicated region
    $region38: #{tpu_custom_call.1} parent=1 // pred_check
      _
    $region39: #{tpu_custom_call.1} parent=1 // pred_check_branch
      %165 = sbr.rel (0) target = $region41
    $region40: #{tpu_custom_call.1} parent=1 // pred_region
      %166 = dma.done [#allocation7], 16
    $region41: #{tpu_custom_call.1} parent=1 // pred_fallthru
      _
    %167 = sfence
    %168 = vsyncpa [#allocation6], 1
    %169 = vsyncpa [#allocation9], 1
    %170 = vsyncpa [#allocation7], 1

</llo_original>
